<compile_context>
chip_gen: v7x
topology: tpu7x:2x2x1
jax: 0.10.0
libtpu: 0.0.40
codegen_flags: <defaults>
</compile_context>

<pallas_src>
import functools

import jax
import jax.numpy as jnp
from jax import lax
from jax.experimental import pallas as pl
from jax.experimental.pallas import tpu as pltpu

EPS = 1e-09


def _round_down(x, m):
    return (x // m) * m


def _vmem_capacity_bytes():
    try:
        return int(pltpu.get_tpu_info().vmem_capacity_bytes)
    except Exception:
        return 64 * 1024 * 1024  # conservative (v7x-sized) fallback


def _num_tensorcores():
    """2 TensorCores per chip on v7x; 1 on v5e/v6e."""
    try:
        kind = jax.devices()[0].device_kind.lower()
    except Exception:
        return 1
    return 2 if ("v7" in kind or "tpu7" in kind or "7x" in kind) else 1


def _cossdr_kernel(out_ref, trg_ref, loss_ref, acc_ref, *, total_rows, tm):
    """Grid = (core_split, row_tiles). acc_ref: (tm, 1) per-row partial sums."""
    p = pl.program_id(0)
    k = pl.program_id(1)
    n_inner = pl.num_programs(1)

    @pl.when(k == 0)
    def _():
        acc_ref[...] = jnp.zeros_like(acc_ref)

    o = out_ref[...].astype(jnp.float32)          # (tm, chunk_size)
    t = trg_ref[...].astype(jnp.float32)          # (tm, chunk_size)

    num = jnp.sum(t * o, axis=-1, keepdims=True)                      # (tm, 1)
    tt = jnp.sum(t * t, axis=-1, keepdims=True)                       # (tm, 1)
    oo = jnp.sum(o * o, axis=-1, keepdims=True)                       # (tm, 1)
    # sqrt(a)*sqrt(b) == sqrt(a*b) for a,b >= 0; same EPS placement as ref.
    contrib = -num / (jnp.sqrt(tt * oo) + EPS)                        # (tm, 1)

    # Mask tail rows (partial trailing block) and duplicate blocks (clamped
    # index_map cells).  Out-of-bounds rows hold unspecified data; jnp.where
    # selects, so garbage/NaN there never propagates.
    row_start = (p * n_inner + k) * tm
    row_ids = row_start + lax.broadcasted_iota(jnp.int32, contrib.shape, 0)
    acc_ref[...] += jnp.where(row_ids < total_rows, contrib, 0.0)

    @pl.when(k == n_inner - 1)
    def _():
        # Single cross-sublane collapse at the very end (not per step).
        partial = jnp.sum(acc_ref[...]) / jnp.float32(total_rows)
        loss_ref[...] = jnp.zeros_like(loss_ref) + partial


def cosw_sdr_loss(output, target, noisy=None, chunk_size=1024, ratio=0.5):
    """output, target: (B, T) with T % chunk_size == 0.  Returns scalar loss."""
    del noisy, ratio  # unused in the reference forward pass
    B = output.shape[0]
    oc = output.reshape(B, -1, chunk_size)
    tc = target.reshape(B, -1, chunk_size)
    rows = B * oc.shape[1]
    oc2 = oc.reshape(rows, chunk_size)
    tc2 = tc.reshape(rows, chunk_size)

    itemsize = jnp.dtype(oc2.dtype).itemsize
    # Sublane multiple for packed dtypes: f32 -> 8, bf16 -> 16, int8/fp8 -> 32.
    sub = {4: 8, 2: 16, 1: 32}.get(itemsize, 8)

    vmem_cap = _vmem_capacity_bytes()
    n_split = _num_tensorcores()

    # --- tiling -----------------------------------------------------------
    if rows < sub * n_split:
        # Tiny problem: one full-extent block (block dim == array dim is legal
        # even when not a sublane multiple).
        n_split = 1
        tm = rows
    else:
        # VMEM budget per row: 2 inputs x 2 pipeline buffers in native dtype,
        # plus generous headroom for f32 upcasts / elementwise intermediates
        # in case they materialize instead of fusing into the reductions.
        per_row_bytes = chunk_size * (4 * itemsize + 20)
        budget = min(vmem_cap - (16 << 20), 96 << 20)
        tm_max = max(sub, min(2048, _round_down(budget // per_row_bytes, sub)))
        tm_fit = max(sub, _round_down(pl.cdiv(rows, n_split), sub))
        tm = min(tm_max, tm_fit)

    total_blocks = pl.cdiv(rows, tm)          # number of real row blocks
    n_inner = pl.cdiv(total_blocks, n_split)
    grid = (n_split, n_inner)

    def row_map(p, k):
        b = p * n_inner + k
        # Clamp so no block starts past the array; the duplicate cell's rows
        # are masked out in the kernel (their logical row ids >= rows).
        return (jnp.minimum(b, total_blocks - 1), 0)

    # vmem_limit: double-buffered inputs + possible f32 intermediates + slack,
    # clamped below physical VMEM (64 MiB on v7x).
    vmem_limit = 4 * tm * chunk_size * itemsize + 3 * tm * chunk_size * 4 + (8 << 20)
    vmem_limit = max(vmem_limit, 32 << 20)
    vmem_limit = min(vmem_limit, vmem_cap - (4 << 20))

    cost = pl.CostEstimate(
        flops=6 * rows * chunk_size,          # 3 muls + 3 adds per element
        transcendentals=rows,                 # fused sqrt per chunk-row
        bytes_accessed=2 * rows * chunk_size * itemsize + n_split * 8 * 128 * 4,
    )

    partials = pl.pallas_call(
        functools.partial(_cossdr_kernel, total_rows=rows, tm=tm),
        out_shape=jax.ShapeDtypeStruct((n_split, 8, 128), jnp.float32),
        grid_spec=pltpu.PrefetchScalarGridSpec(
            num_scalar_prefetch=0,
            grid=grid,
            in_specs=[
                pl.BlockSpec((tm, chunk_size), row_map),
                pl.BlockSpec((tm, chunk_size), row_map),
            ],
            # Each core split owns its own lane-dense (1, 8, 128) output slab.
            out_specs=pl.BlockSpec((1, 8, 128), lambda p, k: (p, 0, 0)),
            scratch_shapes=[pltpu.VMEM((tm, 1), jnp.float32)],
        ),
        compiler_params=pltpu.CompilerParams(
            dimension_semantics=("parallel", "arbitrary"),
            vmem_limit_bytes=int(vmem_limit),
        ),
        cost_estimate=cost,
    )(oc2, tc2)

    # Each split's slab holds sum(per_chunk over its rows) / rows.
    return jnp.sum(partials[:, 0, 0])


def _reference_loss(output, target, chunk_size):
    B = output.shape[0]
    oc = output.reshape(B, -1, chunk_size).astype(jnp.float32)
    tc = target.reshape(B, -1, chunk_size).astype(jnp.float32)
    num = jnp.sum(tc * oc, axis=-1)
    den = jnp.linalg.norm(tc, axis=-1) * jnp.linalg.norm(oc, axis=-1)
    per_chunk = -num / (den + EPS)
    return jnp.mean(jnp.mean(per_chunk, axis=-1))


if __name__ == "__main__":
    key = jax.random.PRNGKey(0)
    k1, k2, k3 = jax.random.split(key, 3)

    # Case 1: small stand-in for the default chunk_size=1024 configuration.
    B = 2
    chunk_size = 256
    n_chunks = 8
    T = n_chunks * chunk_size

    target = jax.random.normal(k1, (B, T), dtype=jnp.float32)
    output = target + 0.1 * jax.random.normal(k2, (B, T), dtype=jnp.float32)
    noisy = target + 0.5 * jax.random.normal(k3, (B, T), dtype=jnp.float32)

    loss = cosw_sdr_loss(output, target, noisy, chunk_size=chunk_size)
    loss = jax.block_until_ready(loss)
    ref = _reference_loss(output, target, chunk_size)
    assert jnp.allclose(loss, ref, atol=1e-5, rtol=1e-5), (loss, ref)

    # Case 2: row count not a multiple of the tile -> exercises in-kernel
    # masking of the partial trailing block (no wrapper-side padding).
    B2, n_chunks2 = 3, 5
    T2 = n_chunks2 * chunk_size
    t2 = jax.random.normal(k1, (B2, T2), dtype=jnp.float32)
    o2 = t2 + 0.2 * jax.random.normal(k2, (B2, T2), dtype=jnp.float32)
    loss2 = jax.block_until_ready(cosw_sdr_loss(o2, t2, chunk_size=chunk_size))
    ref2 = _reference_loss(o2, t2, chunk_size)
    assert jnp.allclose(loss2, ref2, atol=1e-5, rtol=1e-5), (loss2, ref2)

    # Case 3: bf16 inputs -> exercises the dtype-aware sublane rounding path
    # while streaming the native (half-width) dtype from HBM.
    t3 = jax.random.normal(k1, (B, T), dtype=jnp.float32).astype(jnp.bfloat16)
    o3 = (t3.astype(jnp.float32)
          + 0.1 * jax.random.normal(k3, (B, T), dtype=jnp.float32)).astype(jnp.bfloat16)
    loss3 = jax.block_until_ready(cosw_sdr_loss(o3, t3, chunk_size=chunk_size))
    ref3 = _reference_loss(o3, t3, chunk_size)
    assert jnp.allclose(loss3, ref3, atol=1e-5, rtol=1e-5), (loss3, ref3)

    print("KERNEL_OK")
</pallas_src>

<mosaic_0001>
module attributes {stable_mosaic.version = 11 : i64} {
  func.func @_cossdr_kernel(%arg0: i32, %arg1: i32, %arg2: memref<16x256xf32, #tpu.memory_space<vmem>>, %arg3: memref<16x256xf32, #tpu.memory_space<vmem>>, %arg4: memref<1x8x128xf32, #tpu.memory_space<vmem>>, %arg5: memref<16x1xf32, #tpu.memory_space<vmem>>) attributes {dimension_semantics = [#tpu.dimension_semantics<parallel>, #tpu.dimension_semantics<arbitrary>], iteration_bounds = array<i64: 1, 1>, scalar_prefetch = 0 : i64, scratch_operands = 1 : i64, tpu.core_type = #tpu.core_type<tc>, window_params = [{transform_indices = @transform_0, window_bounds = array<i64: 16, 256>}, {transform_indices = @transform_1, window_bounds = array<i64: 16, 256>}, {transform_indices = @transform_2, window_bounds = array<i64: 1, 8, 128>}]} {
    %c0_i32 = arith.constant 0 : i32
    %0 = arith.cmpi eq, %arg1, %c0_i32 : i32
    %1 = arith.extui %0 : i1 to i32
    %c0_i32_0 = arith.constant 0 : i32
    %2 = arith.cmpi ne, %1, %c0_i32_0 : i32
    scf.if %2 {
      %cst_16 = arith.constant 0.000000e+00 : f32
      %37 = vector.broadcast %cst_16 : f32 to vector<16x1xf32>
      %c0_17 = arith.constant 0 : index
      %c0_18 = arith.constant 0 : index
      %38 = vector.load %arg5[%c0_17, %c0_18] : memref<16x1xf32, #tpu.memory_space<vmem>>, vector<16x1xf32>
      tpu.vector_store %arg5[%c0_17, %c0_18], %37 {strides = array<i32>} : memref<16x1xf32, #tpu.memory_space<vmem>>, vector<16x1xf32>,
    } else {
    }
    %c0 = arith.constant 0 : index
    %c0_1 = arith.constant 0 : index
    %3 = vector.load %arg2[%c0, %c0_1] : memref<16x256xf32, #tpu.memory_space<vmem>>, vector<16x256xf32>
    %c0_2 = arith.constant 0 : index
    %c0_3 = arith.constant 0 : index
    %4 = vector.load %arg3[%c0_2, %c0_3] : memref<16x256xf32, #tpu.memory_space<vmem>>, vector<16x256xf32>
    %5 = arith.mulf %4, %3 : vector<16x256xf32>
    %cst = arith.constant dense<0.000000e+00> : vector<16xf32>
    %6 = vector.multi_reduction <add>, %5, %cst [1] : vector<16x256xf32> to vector<16xf32>
    %7 = vector.shape_cast %6 : vector<16xf32> to vector<16x1xf32>
    %8 = arith.mulf %4, %4 : vector<16x256xf32>
    %cst_4 = arith.constant dense<0.000000e+00> : vector<16xf32>
    %9 = vector.multi_reduction <add>, %8, %cst_4 [1] : vector<16x256xf32> to vector<16xf32>
    %10 = vector.shape_cast %9 : vector<16xf32> to vector<16x1xf32>
    %11 = arith.mulf %3, %3 : vector<16x256xf32>
    %cst_5 = arith.constant dense<0.000000e+00> : vector<16xf32>
    %12 = vector.multi_reduction <add>, %11, %cst_5 [1] : vector<16x256xf32> to vector<16xf32>
    %13 = vector.shape_cast %12 : vector<16xf32> to vector<16x1xf32>
    %cst_6 = arith.constant 0.000000e+00 : f32
    %14 = vector.broadcast %cst_6 : f32 to vector<16x1xf32>
    %15 = arith.subf %14, %7 : vector<16x1xf32>
    %16 = arith.mulf %10, %13 : vector<16x1xf32>
    %17 = math.sqrt %16 : vector<16x1xf32>
    %cst_7 = arith.constant 9.99999971E-10 : f32
    %18 = vector.broadcast %cst_7 : f32 to vector<16x1xf32>
    %19 = arith.addf %17, %18 : vector<16x1xf32>
    %20 = arith.divf %15, %19 : vector<16x1xf32>
    %c1_i32 = arith.constant 1 : i32
    %21 = arith.muli %arg0, %c1_i32 : i32
    %22 = arith.addi %21, %arg1 : i32
    %c16_i32 = arith.constant 16 : i32
    %23 = arith.muli %22, %c16_i32 : i32
    %24 = tpu.iota {dimensions = array<i32: 0>} : vector<16x1xi32>
    %25 = vector.broadcast %23 : i32 to vector<16x1xi32>
    %26 = arith.addi %25, %24 : vector<16x1xi32>
    %c0_8 = arith.constant 0 : index
    %c0_9 = arith.constant 0 : index
    %27 = vector.load %arg5[%c0_8, %c0_9] : memref<16x1xf32, #tpu.memory_space<vmem>>, vector<16x1xf32>
    %c16_i32_10 = arith.constant 16 : i32
    %28 = vector.broadcast %c16_i32_10 : i32 to vector<16x1xi32>
    %29 = arith.cmpi slt, %26, %28 : vector<16x1xi32>
    %cst_11 = arith.constant 0.000000e+00 : f32
    %30 = vector.broadcast %cst_11 : f32 to vector<16x1xf32>
    %31 = arith.select %29, %20, %30 : vector<16x1xi1>, vector<16x1xf32>
    %32 = arith.addf %27, %31 : vector<16x1xf32>
    %c0_12 = arith.constant 0 : index
    %c0_13 = arith.constant 0 : index
    %33 = vector.load %arg5[%c0_12, %c0_13] : memref<16x1xf32, #tpu.memory_space<vmem>>, vector<16x1xf32>
    tpu.vector_store %arg5[%c0_12, %c0_13], %32 {strides = array<i32>} : memref<16x1xf32, #tpu.memory_space<vmem>>, vector<16x1xf32>,
    %c0_i32_14 = arith.constant 0 : i32
    %34 = arith.cmpi eq, %arg1, %c0_i32_14 : i32
    %35 = arith.extui %34 : i1 to i32
    %c0_i32_15 = arith.constant 0 : i32
    %36 = arith.cmpi ne, %35, %c0_i32_15 : i32
    scf.if %36 {
      %c0_16 = arith.constant 0 : index
      %c0_17 = arith.constant 0 : index
      %37 = vector.load %arg5[%c0_16, %c0_17] : memref<16x1xf32, #tpu.memory_space<vmem>>, vector<16x1xf32>
      %38 = vector.shape_cast %37 : vector<16x1xf32> to vector<1x16x1xf32>
      %cst_18 = arith.constant dense<0.000000e+00> : vector<1xf32>
      %39 = vector.multi_reduction <add>, %38, %cst_18 [1, 2] : vector<1x16x1xf32> to vector<1xf32>
      %40 = vector.shape_cast %39 : vector<1xf32> to vector<1x1x1xf32>
      %41 = vector.extract %40[0, 0, 0] : f32 from vector<1x1x1xf32>
      %cst_19 = arith.constant 1.600000e+01 : f32
      %42 = arith.divf %41, %cst_19 : f32
      %cst_20 = arith.constant 0.000000e+00 : f32
      %43 = vector.broadcast %cst_20 : f32 to vector<1x8x128xf32>
      %44 = vector.broadcast %42 : f32 to vector<1x8x128xf32>
      %45 = arith.addf %43, %44 : vector<1x8x128xf32>
      %c0_21 = arith.constant 0 : index
      %c0_22 = arith.constant 0 : index
      %c0_23 = arith.constant 0 : index
      %46 = vector.load %arg4[%c0_21, %c0_22, %c0_23] : memref<1x8x128xf32, #tpu.memory_space<vmem>>, vector<1x8x128xf32>
      tpu.vector_store %arg4[%c0_21, %c0_22, %c0_23], %45 {strides = array<i32>} : memref<1x8x128xf32, #tpu.memory_space<vmem>>, vector<1x8x128xf32>,
    } else {
    }
    return
  }
  func.func @transform_0(%arg0: i32, %arg1: i32) -> (i32, i32) {
    %c1_i32 = arith.constant 1 : i32
    %0 = arith.muli %arg0, %c1_i32 : i32
    %1 = arith.addi %0, %arg1 : i32
    %c0_i32 = arith.constant 0 : i32
    %2 = arith.minsi %1, %c0_i32 : i32
    %c0_i32_0 = arith.constant 0 : i32
    %c0_i32_1 = arith.constant 0 : i32
    return %2, %c0_i32_0 : i32, i32
  }
  func.func @transform_1(%arg0: i32, %arg1: i32) -> (i32, i32) {
    %c1_i32 = arith.constant 1 : i32
    %0 = arith.muli %arg0, %c1_i32 : i32
    %1 = arith.addi %0, %arg1 : i32
    %c0_i32 = arith.constant 0 : i32
    %2 = arith.minsi %1, %c0_i32 : i32
    %c0_i32_0 = arith.constant 0 : i32
    %c0_i32_1 = arith.constant 0 : i32
    return %2, %c0_i32_0 : i32, i32
  }
  func.func @transform_2(%arg0: i32, %arg1: i32) -> (i32, i32, i32) {
    %c0_i32 = arith.constant 0 : i32
    %c0_i32_0 = arith.constant 0 : i32
    %c0_i32_1 = arith.constant 0 : i32
    return %arg0, %c0_i32, %c0_i32_0 : i32, i32, i32
  }
}

</mosaic_0001>

<llo_original>
// kernel: tpu_custom_call.1
$region0: #{tpu_custom_call.1}
  #allocation0 [shape = 'u32[]', space=smem, size = 0x4, offset = 0x4, fixed_abs, tag = 'smem constant byte address 0x4 - core index']
  #allocation1 [shape = 'u32[144,128]{1,0:T(1,128)}', space=vmem, size = 0x12000, scoped, tag = 'internal scratch']
  #allocation2 [shape = 'f32[16,1]{1,0:T(8,128)}', space=vmem, size = 0x2000, scoped, tag = 'scratch operand']
  %s0 = inlined_call_operand.hbm [shape: f32[16,256], index: 0, kind: input, shape index: {}]
  %s1 = inlined_call_operand.hbm [shape: f32[16,256], index: 1, kind: input, shape index: {}]
  %s2 = inlined_call_operand.hbm [shape: f32[1,8,128], index: 2, kind: output, shape index: {}]
  %s3 = sld [smem:[#allocation0]]
  $region34: #{tpu_custom_call.1} parent=0
    _
  %s5 = ssub.s32 1, %s3
  %s6 = scalar_select 0, %s5, %s3
  $region1: #{tpu_custom_call.1} parent=0
    #allocation3 [shape = 'u8[16384]{0}', space=vmem, size = 0x4000, scoped, tag = 'input window, operand 0, single buffered']
    #allocation4 [shape = 's32[1]{0}', space=sflag, size = 0x4, scoped, tag = 'scoped memory for tpu_custom_call.1']
    #allocation5 [shape = 's32[1]{0}', space=sflag, size = 0x4, scoped, tag = 'scoped memory for tpu_custom_call.1']
    #allocation6 [shape = 'u8[16384]{0}', space=vmem, size = 0x4000, scoped, tag = 'input window, operand 1, single buffered']
    #allocation7 [shape = 's32[1]{0}', space=sflag, size = 0x4, scoped, tag = 'scoped memory for tpu_custom_call.1']
    #allocation8 [shape = 'u8[4096]{0}', space=vmem, size = 0x1000, scoped, tag = 'output window, operand 0, single buffered']
    %7 = vsyncpa [#allocation4], 0
    %8 = vsyncpa [#allocation7], 0
    %9 = vsyncpa [#allocation5], 0
    // Predicated region
    $region2: #{tpu_custom_call.1} parent=1 // pred_check
      _
    $region3: #{tpu_custom_call.1} parent=1 // pred_check_branch
      %11 = sbr.rel (0) target = $region5
    $region4: #{tpu_custom_call.1} parent=1 // pred_region
      %s12 = sadd.s32 0, 0
      %p13 = scmp.lt.s32.totalorder %s12, 0
      %s14 = scalar_select %p13, %s12, 0
      %s15 = smul.u32 2, %s14
      %s17 = ssub.s32 512, 512
      %18 = vsyncadd [#allocation4], %s17
      %s19 = smul.addr %s15, 2
      %s20 = smul.addr %s19, 128
      %s21 = scalar_lea.hbm %s0, %s20
      %s22 = sshll.u32 [#allocation3], 4
      %s23 = int_to_ptr.vmem [resolvable:$true] %s22
      %28 = dma.hbm_to_vmem [thread:$0]  %s21, 512, %s23, [#allocation4], 256, 256, 16
    $region5: #{tpu_custom_call.1} parent=1 // pred_fallthru
      _
    // Predicated region
    $region6: #{tpu_custom_call.1} parent=1 // pred_check
      _
    $region7: #{tpu_custom_call.1} parent=1 // pred_check_branch
      %30 = sbr.rel (0) target = $region9
    $region8: #{tpu_custom_call.1} parent=1 // pred_region
      %s31 = sadd.s32 0, 0
      %p32 = scmp.lt.s32.totalorder %s31, 0
      %s33 = scalar_select %p32, %s31, 0
      %s34 = smul.u32 2, %s33
      %s36 = ssub.s32 512, 512
      %37 = vsyncadd [#allocation7], %s36
      %s38 = smul.addr %s34, 2
      %s39 = smul.addr %s38, 128
      %s40 = scalar_lea.hbm %s1, %s39
      %s41 = sshll.u32 [#allocation6], 4
      %s42 = int_to_ptr.vmem [resolvable:$true] %s41
      %47 = dma.hbm_to_vmem [thread:$0]  %s40, 512, %s42, [#allocation7], 256, 256, 16
    $region9: #{tpu_custom_call.1} parent=1 // pred_fallthru
      _
    // Predicated region
    $region10: #{tpu_custom_call.1} parent=1 // pred_check
      _
    $region11: #{tpu_custom_call.1} parent=1 // pred_check_branch
      %49 = sbr.rel (0) target = $region13
    $region12: #{tpu_custom_call.1} parent=1 // pred_region
      %50 = dma.done [#allocation4], 512
    $region13: #{tpu_custom_call.1} parent=1 // pred_fallthru
      _
    // Predicated region
    $region14: #{tpu_custom_call.1} parent=1 // pred_check
      _
    $region15: #{tpu_custom_call.1} parent=1 // pred_check_branch
      %52 = sbr.rel (0) target = $region17
    $region16: #{tpu_custom_call.1} parent=1 // pred_region
      %53 = dma.done [#allocation7], 512
    $region17: #{tpu_custom_call.1} parent=1 // pred_fallthru
      _
    %s54 = sadd.s32 0, 0
    %p55 = scmp.lt.s32.totalorder %s54, 0
    %s56 = scalar_select %p55, %s54, 0
    %s57 = smul.u32 2, %s56
    %s58 = sadd.s32 0, 0
    %p59 = scmp.lt.s32.totalorder %s58, 0
    %s60 = scalar_select %p59, %s58, 0
    %s61 = smul.u32 2, %s60
    %p62 = scmp.eq.s32.totalorder 0, 0
    // Predicated region
    $region18: #{tpu_custom_call.1} parent=1 // pred_check
      %p63 = pneg %p62
    $region19: #{tpu_custom_call.1} parent=1 // pred_check_branch
      %65 = sbr.rel (%p63) target = $region21
    $region20: #{tpu_custom_call.1} parent=1 // pred_region
      %vm66 = vcmask 7168
      %67 = vst.msk [vmem:[#allocation2] sm:$0xff] %vm66, 0.0
      %68 = vst.msk [vmem:[#allocation2 + $0x8] sm:$0xff] %vm66, 0.0
    $region21: #{tpu_custom_call.1} parent=1 // pred_fallthru
      _
    %v69 = vld [vmem:[#allocation3] sm:$0xff]
    %v70 = vld [vmem:[#allocation3 + $0x8] sm:$0xff]
    %v71 = vld [vmem:[#allocation3 + $0x10] sm:$0xff]
    %v72 = vld [vmem:[#allocation3 + $0x18] sm:$0xff]
    %v73 = vld [vmem:[#allocation6] sm:$0xff]
    %v74 = vld [vmem:[#allocation6 + $0x8] sm:$0xff]
    %v75 = vld [vmem:[#allocation6 + $0x10] sm:$0xff]
    %v76 = vld [vmem:[#allocation6 + $0x18] sm:$0xff]
    %v77 = vmul.f32 %v73, %v69
    %v78 = vmul.f32 %v74, %v70
    %v79 = vmul.f32 %v75, %v71
    %v80 = vmul.f32 %v76, %v72
    %v81 = vadd.f32 %v77, %v78
    %82 = vadd.xlane.f32.xlu0 %v81
    %v83 = vpop.xlane.xlu0 %82
    %v84 = vadd.f32 %v79, %v80
    %85 = vadd.xlane.f32.xlu0 %v84
    %v86 = vpop.xlane.xlu0 %85
    %v87 = vmul.f32 %v73, %v73
    %v88 = vmul.f32 %v74, %v74
    %v89 = vmul.f32 %v75, %v75
    %v90 = vmul.f32 %v76, %v76
    %v91 = vadd.f32 %v87, %v88
    %92 = vadd.xlane.f32.xlu0 %v91
    %v93 = vpop.xlane.xlu0 %92
    %v94 = vadd.f32 %v89, %v90
    %95 = vadd.xlane.f32.xlu0 %v94
    %v96 = vpop.xlane.xlu0 %95
    %v97 = vmul.f32 %v69, %v69
    %v98 = vmul.f32 %v70, %v70
    %v99 = vmul.f32 %v71, %v71
    %v100 = vmul.f32 %v72, %v72
    %v101 = vadd.f32 %v97, %v98
    %102 = vadd.xlane.f32.xlu0 %v101
    %v103 = vpop.xlane.xlu0 %102
    %v104 = vadd.f32 %v99, %v100
    %105 = vadd.xlane.f32.xlu0 %v104
    %v106 = vpop.xlane.xlu0 %105
    %v107 = vsub.f32 0.0, %v83
    %v108 = vsub.f32 0.0, %v86
    %v109 = vmul.f32 %v93, %v103
    %v110 = vmul.f32 %v96, %v106
    %v111 = vrsqrt.pop %v109
    %v112 = vmul.f32 %v109, %v111
    %vm113 = vcmp.eq.f32.partialorder %v109, inf
    %v114 = vsel %vm113, %v109, %v112
    %vm115 = vcmp.eq.f32.partialorder %v109, 0.0
    %v116 = vand.u32 %v109, 2147483648
    %v117 = vsel %vm115, %v116, %v114
    %v118 = vrsqrt.pop %v110
    %v119 = vmul.f32 %v110, %v118
    %vm120 = vcmp.eq.f32.partialorder %v110, inf
    %v121 = vsel %vm120, %v110, %v119
    %vm122 = vcmp.eq.f32.partialorder %v110, 0.0
    %v123 = vand.u32 %v110, 2147483648
    %v124 = vsel %vm122, %v123, %v121
    %v125 = vadd.f32 %v117, 1e-09
    %v126 = vadd.f32 %v124, 1e-09
    %v127 = vrcp.pop %v125
    %v128 = vmul.f32 %v107, %v127
    %v129 = vrcp.pop %v126
    %v130 = vmul.f32 %v108, %v129
    %s131 = sadd.s32 0, 0
    %s132 = smul.u32 %s131, 16
    %v133 = vlaneseq
    %v134 = vshrl.u32 %v133, 7
    %v135 = vadd.s32 %v134, 8
    %v136 = vstv %s132
    %v137 = vadd.s32 %v136, %v134
    %v138 = vadd.s32 %v136, %v135
    %v139 = vld [vmem:[#allocation2] sm:$0xff]
    %v140 = vld [vmem:[#allocation2 + $0x8] sm:$0xff]
    %vm141 = vcmp.lt.s32.totalorder %v137, 16
    %vm142 = vcmp.lt.s32.totalorder %v138, 16
    %v143 = vsel %vm141, %v128, 0.0
    %v144 = vsel %vm142, %v130, 0.0
    %v145 = vadd.f32 %v139, %v143
    %v146 = vadd.f32 %v140, %v144
    %vm147 = vcmask 7168
    %148 = vst.msk [vmem:[#allocation2] sm:$0xff] %vm147, %v145
    %149 = vst.msk [vmem:[#allocation2 + $0x8] sm:$0xff] %vm147, %v146
    // Predicated region
    $region22: #{tpu_custom_call.1} parent=1 // pred_check
      %p150 = pneg %p62
    $region23: #{tpu_custom_call.1} parent=1 // pred_check_branch
      %152 = sbr.rel (%p150) target = $region25
    $region24: #{tpu_custom_call.1} parent=1 // pred_region
      %v153 = vld [vmem:[#allocation2] sm:$0xff]
      %v154 = vld [vmem:[#allocation2 + $0x8] sm:$0xff]
      %v155 = vsel %vm147, %v153, 0.0
      %v156 = vsel %vm147, %v154, 0.0
      %v157 = vadd.f32 %v155, %v156
      %158 = vadd.xlane.f32.xlu0 %v157
      %v159 = vpop.xlane.xlu0 %158
      %v160 = vrot.slane %v159, 4
      %v161 = vadd.f32 %v159, %v160
      %v162 = vrot.slane %v161, 2
      %v163 = vadd.f32 %v161, %v162
      %v164 = vrot.slane %v163, 1
      %v165 = vadd.f32 %v163, %v164
      %s166 = vtos %v165
      %v167 = vrcp.pop 16.0
      %s168 = vtos %v167
      %s169 = smul.f32 %s166, %s168
      %v170 = vstv %s169
      %v171 = vadd.f32 %v170, 0.0
      %172 = vst [vmem:[#allocation8] sm:$0xff] %v171
    $region25: #{tpu_custom_call.1} parent=1 // pred_fallthru
      _
    // Predicated region
    $region26: #{tpu_custom_call.1} parent=1 // pred_check
      _
    $region27: #{tpu_custom_call.1} parent=1 // pred_check_branch
      %174 = sbr.rel (0) target = $region29
    $region28: #{tpu_custom_call.1} parent=1 // pred_region
      %s176 = ssub.s32 128, 128
      %177 = vsyncadd [#allocation5], %s176
      %s179 = sshll.u32 [#allocation8], 4
      %s180 = int_to_ptr.vmem [resolvable:$true] %s179
      %182 = dma.vmem_to_hbm [thread:$0]  %s180, 128, %s2, [#allocation5]
    $region29: #{tpu_custom_call.1} parent=1 // pred_fallthru
      _
    // Predicated region
    $region30: #{tpu_custom_call.1} parent=1 // pred_check
      _
    $region31: #{tpu_custom_call.1} parent=1 // pred_check_branch
      %184 = sbr.rel (0) target = $region33
    $region32: #{tpu_custom_call.1} parent=1 // pred_region
      %185 = dma.done [#allocation5], 128
    $region33: #{tpu_custom_call.1} parent=1 // pred_fallthru
      _
    %186 = vsyncpa [#allocation4], 1
    %187 = vsyncpa [#allocation7], 1
    %188 = vsyncpa [#allocation5], 1

</llo_original>
